<compile_context>
chip_gen: v7x
topology: tpu7x:2x2x1
jax: 0.10.0
libtpu: 0.0.40
codegen_flags: <defaults>
</compile_context>

<pallas_src>
import numpy as np
import jax
import jax.numpy as jnp
from jax.experimental import pallas as pl
from jax.experimental.pallas import tpu as pltpu


def _downsample1d_kernel(w_ref, b_ref, xe_ref, xo_ref, o_ref):
    # w_ref : (3, C_out, C_in)   conv taps (tap-major)
    # b_ref : (C_out, 1)         bias
    # xe_ref: (C_in, L_out + 1)  even-indexed columns of the padded input
    # xo_ref: (C_in, L_out)      odd-indexed  columns of the padded input
    # o_ref : (C_out, L_out)
    l_out = o_ref.shape[-1]
    xe = xe_ref[...]
    xo = xo_ref[...]

    acc = jnp.dot(w_ref[0], xe[:, :l_out], preferred_element_type=jnp.float32)
    acc += jnp.dot(w_ref[1], xo, preferred_element_type=jnp.float32)
    acc += jnp.dot(w_ref[2], xe[:, 1:l_out + 1], preferred_element_type=jnp.float32)
    acc += b_ref[...].astype(jnp.float32)        # (C,1) broadcasts over lanes
    o_ref[...] = acc.astype(o_ref.dtype)


def downsample1d(x, weight, bias):
    """y = Conv1d(dim, dim, 3, stride=2, padding=1)(x)  — Pallas TPU kernel.

    x:      (B, C, L)
    weight: (C, C, 3)   (PyTorch Conv1d layout: out, in, k)
    bias:   (C,)
    returns (B, C, ceil(L/2))
    """
    B, C, L = x.shape
    C_out, C_in, K = weight.shape
    assert (C_out, C_in, K) == (C, C, 3)
    L_out = (L - 1) // 2 + 1

    # Zero-pad by 1 on each side and de-interleave even/odd columns so the
    # kernel only needs contiguous lane-dense slices (no strided loads).
    xp = jnp.pad(x, ((0, 0), (0, 0), (1, 1)))
    x_ev = xp[:, :, 0::2][:, :, :L_out + 1]    # xp[..., 2t]      -> (B, C, L_out+1)
    x_od = xp[:, :, 1::2][:, :, :L_out]        # xp[..., 2t + 1]  -> (B, C, L_out)

    w = jnp.transpose(weight, (2, 0, 1))       # (3, C_out, C_in)
    b2 = bias.reshape(C, 1)

    return pl.pallas_call(
        _downsample1d_kernel,
        out_shape=jax.ShapeDtypeStruct((B, C, L_out), x.dtype),
        grid=(B,),
        in_specs=[
            pl.BlockSpec((3, C, C), lambda b: (0, 0, 0)),             # weight (resident)
            pl.BlockSpec((C, 1), lambda b: (0, 0)),                   # bias   (resident)
            pl.BlockSpec((None, C, L_out + 1), lambda b: (b, 0, 0)),  # even columns
            pl.BlockSpec((None, C, L_out), lambda b: (b, 0, 0)),      # odd columns
        ],
        out_specs=pl.BlockSpec((None, C, L_out), lambda b: (b, 0, 0)),
        compiler_params=pltpu.CompilerParams(
            dimension_semantics=("parallel",)),
    )(w, b2, x_ev, x_od)


if __name__ == "__main__":
    key = jax.random.PRNGKey(0)
    k1, k2, k3 = jax.random.split(key, 3)

    B, dim, L = 2, 4, 16
    x = jax.random.normal(k1, (B, dim, L), dtype=jnp.float32)

    # PyTorch Conv1d default init: U(-bound, bound), bound = 1/sqrt(C_in * K)
    bound = 1.0 / np.sqrt(dim * 3)
    weight = jax.random.uniform(k2, (dim, dim, 3), jnp.float32, -bound, bound)
    bias = jax.random.uniform(k3, (dim,), jnp.float32, -bound, bound)

    y = downsample1d(x, weight, bias)
    jax.block_until_ready(y)

    # Reference: XLA's conv with exact Conv1d(3, stride=2, padding=1) semantics.
    ref = jax.lax.conv_general_dilated(
        x, weight, window_strides=(2,), padding=((1, 1),),
        dimension_numbers=('NCH', 'OIH', 'NCH')) + bias.reshape(1, dim, 1)

    assert y.shape == (B, dim, (L - 1) // 2 + 1), y.shape
    err = np.max(np.abs(np.asarray(y) - np.asarray(ref)))
    assert np.allclose(np.asarray(y), np.asarray(ref), rtol=1e-5, atol=1e-5), err

    print("KERNEL_OK")
</pallas_src>

<mosaic_0001>
module attributes {stable_mosaic.version = 11 : i64} {
  func.func @_downsample1d_kernel(%arg0: i32, %arg1: memref<3x4x4xf32, #tpu.memory_space<vmem>>, %arg2: memref<4x1xf32, #tpu.memory_space<vmem>>, %arg3: memref<1x4x9xf32, #tpu.memory_space<vmem>>, %arg4: memref<1x4x8xf32, #tpu.memory_space<vmem>>, %arg5: memref<1x4x8xf32, #tpu.memory_space<vmem>>) attributes {dimension_semantics = [#tpu.dimension_semantics<parallel>], iteration_bounds = array<i64: 2>, scalar_prefetch = 0 : i64, scratch_operands = 0 : i64, tpu.core_type = #tpu.core_type<tc>, window_params = [{pipeline_mode = #tpu.pipeline_mode<synchronous>, transform_indices = @transform_0, window_bounds = array<i64: 3, 4, 4>}, {pipeline_mode = #tpu.pipeline_mode<synchronous>, transform_indices = @transform_1, window_bounds = array<i64: 4, 1>}, {transform_indices = @transform_2, window_bounds = array<i64: 1, 4, 9>}, {transform_indices = @transform_3, window_bounds = array<i64: 1, 4, 8>}, {transform_indices = @transform_4, window_bounds = array<i64: 1, 4, 8>}]} {
    %c0 = arith.constant 0 : index
    %c0_0 = arith.constant 0 : index
    %c0_1 = arith.constant 0 : index
    %0 = vector.load %arg3[%c0, %c0_0, %c0_1] : memref<1x4x9xf32, #tpu.memory_space<vmem>>, vector<1x4x9xf32>
    %1 = vector.shape_cast %0 : vector<1x4x9xf32> to vector<4x9xf32>
    %c0_2 = arith.constant 0 : index
    %c0_3 = arith.constant 0 : index
    %c0_4 = arith.constant 0 : index
    %2 = vector.load %arg4[%c0_2, %c0_3, %c0_4] : memref<1x4x8xf32, #tpu.memory_space<vmem>>, vector<1x4x8xf32>
    %3 = vector.shape_cast %2 : vector<1x4x8xf32> to vector<4x8xf32>
    %c0_5 = arith.constant 0 : index
    %c0_6 = arith.constant 0 : index
    %c0_7 = arith.constant 0 : index
    %4 = vector.load %arg1[%c0_5, %c0_6, %c0_7] : memref<3x4x4xf32, #tpu.memory_space<vmem>>, vector<1x4x4xf32>
    %5 = vector.shape_cast %4 : vector<1x4x4xf32> to vector<4x4xf32>
    %6 = vector.extract_strided_slice %1 {offsets = [0, 0], sizes = [4, 8], strides = [1, 1]} : vector<4x9xf32> to vector<4x8xf32>
    %cst = arith.constant dense<0.000000e+00> : vector<4x8xf32>
    %7 = tpu.matmul %5, %6, %cst {dimension_numbers = #tpu.dot_dimension_numbers<[1], [0], [0], [1], [0, 0, 1, 1], [], []>} : vector<4x4xf32>, vector<4x8xf32>, vector<4x8xf32> -> vector<4x8xf32>
    %c1 = arith.constant 1 : index
    %c0_8 = arith.constant 0 : index
    %c0_9 = arith.constant 0 : index
    %8 = vector.load %arg1[%c1, %c0_8, %c0_9] : memref<3x4x4xf32, #tpu.memory_space<vmem>>, vector<1x4x4xf32>
    %9 = vector.shape_cast %8 : vector<1x4x4xf32> to vector<4x4xf32>
    %cst_10 = arith.constant dense<0.000000e+00> : vector<4x8xf32>
    %10 = tpu.matmul %9, %3, %cst_10 {dimension_numbers = #tpu.dot_dimension_numbers<[1], [0], [0], [1], [0, 0, 1, 1], [], []>} : vector<4x4xf32>, vector<4x8xf32>, vector<4x8xf32> -> vector<4x8xf32>
    %11 = arith.addf %7, %10 : vector<4x8xf32>
    %c2 = arith.constant 2 : index
    %c0_11 = arith.constant 0 : index
    %c0_12 = arith.constant 0 : index
    %12 = vector.load %arg1[%c2, %c0_11, %c0_12] : memref<3x4x4xf32, #tpu.memory_space<vmem>>, vector<1x4x4xf32>
    %13 = vector.shape_cast %12 : vector<1x4x4xf32> to vector<4x4xf32>
    %14 = vector.extract_strided_slice %1 {offsets = [0, 1], sizes = [4, 8], strides = [1, 1]} : vector<4x9xf32> to vector<4x8xf32>
    %cst_13 = arith.constant dense<0.000000e+00> : vector<4x8xf32>
    %15 = tpu.matmul %13, %14, %cst_13 {dimension_numbers = #tpu.dot_dimension_numbers<[1], [0], [0], [1], [0, 0, 1, 1], [], []>} : vector<4x4xf32>, vector<4x8xf32>, vector<4x8xf32> -> vector<4x8xf32>
    %16 = arith.addf %11, %15 : vector<4x8xf32>
    %c0_14 = arith.constant 0 : index
    %c0_15 = arith.constant 0 : index
    %17 = vector.load %arg2[%c0_14, %c0_15] : memref<4x1xf32, #tpu.memory_space<vmem>>, vector<4x1xf32>
    %18 = vector.broadcast %17 : vector<4x1xf32> to vector<4x8xf32>
    %19 = arith.addf %16, %18 : vector<4x8xf32>
    %c0_16 = arith.constant 0 : index
    %c0_17 = arith.constant 0 : index
    %c0_18 = arith.constant 0 : index
    %20 = vector.load %arg5[%c0_16, %c0_17, %c0_18] : memref<1x4x8xf32, #tpu.memory_space<vmem>>, vector<1x4x8xf32>
    %21 = vector.shape_cast %20 : vector<1x4x8xf32> to vector<4x8xf32>
    %22 = vector.shape_cast %19 : vector<4x8xf32> to vector<1x4x8xf32>
    tpu.vector_store %arg5[%c0_16, %c0_17, %c0_18], %22 {strides = array<i32>} : memref<1x4x8xf32, #tpu.memory_space<vmem>>, vector<1x4x8xf32>,
    return
  }
  func.func @transform_0(%arg0: i32) -> (i32, i32, i32) {
    %c0_i32 = arith.constant 0 : i32
    %c0_i32_0 = arith.constant 0 : i32
    %c0_i32_1 = arith.constant 0 : i32
    %c0_i32_2 = arith.constant 0 : i32
    return %c0_i32, %c0_i32_0, %c0_i32_1 : i32, i32, i32
  }
  func.func @transform_1(%arg0: i32) -> (i32, i32) {
    %c0_i32 = arith.constant 0 : i32
    %c0_i32_0 = arith.constant 0 : i32
    %c0_i32_1 = arith.constant 0 : i32
    return %c0_i32, %c0_i32_0 : i32, i32
  }
  func.func @transform_2(%arg0: i32) -> (i32, i32, i32) {
    %c0_i32 = arith.constant 0 : i32
    %c0_i32_0 = arith.constant 0 : i32
    %c0_i32_1 = arith.constant 0 : i32
    return %arg0, %c0_i32, %c0_i32_0 : i32, i32, i32
  }
  func.func @transform_3(%arg0: i32) -> (i32, i32, i32) {
    %c0_i32 = arith.constant 0 : i32
    %c0_i32_0 = arith.constant 0 : i32
    %c0_i32_1 = arith.constant 0 : i32
    return %arg0, %c0_i32, %c0_i32_0 : i32, i32, i32
  }
  func.func @transform_4(%arg0: i32) -> (i32, i32, i32) {
    %c0_i32 = arith.constant 0 : i32
    %c0_i32_0 = arith.constant 0 : i32
    %c0_i32_1 = arith.constant 0 : i32
    return %arg0, %c0_i32, %c0_i32_0 : i32, i32, i32
  }
}

</mosaic_0001>

<llo_original>
// kernel: tpu_custom_call.1
$region0: #{tpu_custom_call.1}
  #allocation0 [shape = 'u32[]', space=smem, size = 0x4, offset = 0x4, fixed_abs, tag = 'smem constant byte address 0x4 - core index']
  #allocation1 [shape = 'u32[144,128]{1,0:T(1,128)}', space=vmem, size = 0x12000, scoped, tag = 'internal scratch']
  %s0 = inlined_call_operand.hbm [shape: f32[3,4,4], index: 0, kind: input, shape index: {}]
  %s1 = inlined_call_operand.vmem [shape: f32[4,1], index: 1, kind: input, shape index: {}]
  %s2 = inlined_call_operand.vmem [shape: f32[2,4,9], index: 2, kind: input, shape index: {}]
  %s3 = inlined_call_operand.vmem [shape: f32[2,4,8], index: 3, kind: input, shape index: {}]
  %s4 = inlined_call_operand.hbm [shape: f32[2,4,8], index: 4, kind: output, shape index: {}]
  %s5 = sld [smem:[#allocation0]]
  $region53: #{tpu_custom_call.1} parent=0
    _
  %s7 = ssub.s32 1, %s5
  %s8 = scalar_select 0, %s7, %s5
  $region1: #{tpu_custom_call.1} parent=0
    #allocation2 [shape = 'u8[6144]{0}', space=vmem, size = 0x1800, scoped, tag = 'input window, operand 0, single buffered']
    #allocation3 [shape = 's32[2]{0}', space=sflag, size = 0x8, scoped, tag = 'scoped memory for tpu_custom_call.1']
    #allocation4 [shape = 's32[2]{0}', space=sflag, size = 0x8, scoped, tag = 'scoped memory for tpu_custom_call.1']
    #allocation5 [shape = 'u8[4096]{0}', space=vmem, size = 0x1000, scoped, tag = 'output window, operand 0']
    %9 = vsyncpa [#allocation3], 0
    %10 = vsyncpa [#allocation4], 0
    %s11 = scalar_lea.sflag [#allocation4], 1
    %12 = vsyncpa %s11, 0
    loop: start=0, step=1, limit=4
    $region2: #{tpu_custom_call.1} parent=1 // loop_pre_header
      _
    $region3: #{tpu_custom_call.1} parent=1 // loop_header
      %s14 = sphi 0, %s18
      %p15 = scmp.ge.s32.totalorder %s14, 4
      %s22 = sphi 0, %s22
      %s24 = sphi 0, %s22
      %s25 = sphi 0, %s24
      %s39 = sphi 0, %s25
      %s43 = sphi 0, %s43
      %s45 = sphi 0, %s43
      %s46 = sphi 0, %s45
      %s60 = sphi 0, %s46
      %s66 = sphi 0, %s68
      %s69 = sphi 0, %s66
      %s70 = sphi 0, %s69
      %s86 = sphi 0, %s70
      %s92 = sphi 0, %s94
      %s95 = sphi 0, %s92
      %s96 = sphi 0, %s95
      %s112 = sphi 0, %s96
      %s118 = sphi 0, %s120
      %s121 = sphi 0, %s118
      %s122 = sphi 0, %s121
      %s138 = sphi 0, %s122
    $region4: #{tpu_custom_call.1} parent=1 // loop_header_branch
      %17 = sbr.rel (%p15) target = $region8
    $region5: #{tpu_custom_call.1} parent=1 // loop_body
      %s19 = ssub.s32 %s14, 1
      %s20 = ssub.s32 %s14, 2
      %s21 = sadd.s32 %s14, 1
      %s23 = sadd.s32 %s22, 1
      %p26 = scmp.eq.s32.totalorder %s14, 1
      %p27 = scmp.ne.s32.totalorder %s22, %s24
      %p28 = scmp.eq.s32.totalorder %s14, 0
      %p29 = por %p27, %p28
      %p30 = scmp.ne.s32.totalorder %s22, %s24
      %p31 = scmp.eq.s32.totalorder %s19, 1
      %p32 = por %p30, %p31
      %p33 = scmp.ne.s32.totalorder %s24, %s25
      %p34 = scmp.eq.s32.totalorder %s19, 0
      %p35 = por %p33, %p34
      %p36 = scmp.ne.s32.totalorder %s24, %s25
      %p37 = scmp.eq.s32.totalorder %s20, 1
      %p38 = por %p36, %p37
      %p40 = scmp.ne.s32.totalorder %s25, %s39
      %p41 = scmp.eq.s32.totalorder %s20, 0
      %p42 = por %p40, %p41
      %s44 = sadd.s32 %s43, 1
      %p47 = scmp.eq.s32.totalorder %s14, 1
      %p48 = scmp.ne.s32.totalorder %s43, %s45
      %p49 = scmp.eq.s32.totalorder %s14, 0
      %p50 = por %p48, %p49
      %p51 = scmp.ne.s32.totalorder %s43, %s45
      %p52 = scmp.eq.s32.totalorder %s19, 1
      %p53 = por %p51, %p52
      %p54 = scmp.ne.s32.totalorder %s45, %s46
      %p55 = scmp.eq.s32.totalorder %s19, 0
      %p56 = por %p54, %p55
      %p57 = scmp.ne.s32.totalorder %s45, %s46
      %p58 = scmp.eq.s32.totalorder %s20, 1
      %p59 = por %p57, %p58
      %p61 = scmp.ne.s32.totalorder %s46, %s60
      %p62 = scmp.eq.s32.totalorder %s20, 0
      %p63 = por %p61, %p62
      %s64 = ssub.s32 %s14, %s21
      %p65 = scmp.eq.s32.totalorder %s64, 0
      %s67 = sadd.s32 %s66, 1
      %s68 = scalar_select %p65, %s66, %s67
      %p71 = pneg %p65
      %p72 = scmp.eq.s32.totalorder %s14, 1
      %p73 = por %p71, %p72
      %p74 = scmp.ne.s32.totalorder %s66, %s69
      %p75 = scmp.eq.s32.totalorder %s14, 0
      %p76 = por %p74, %p75
      %p77 = scmp.ne.s32.totalorder %s66, %s69
      %p78 = scmp.eq.s32.totalorder %s19, 1
      %p79 = por %p77, %p78
      %p80 = scmp.ne.s32.totalorder %s69, %s70
      %p81 = scmp.eq.s32.totalorder %s19, 0
      %p82 = por %p80, %p81
      %p83 = scmp.ne.s32.totalorder %s69, %s70
      %p84 = scmp.eq.s32.totalorder %s20, 1
      %p85 = por %p83, %p84
      %p87 = scmp.ne.s32.totalorder %s70, %s86
      %p88 = scmp.eq.s32.totalorder %s20, 0
      %p89 = por %p87, %p88
      %s90 = ssub.s32 %s14, %s21
      %p91 = scmp.eq.s32.totalorder %s90, 0
      %s93 = sadd.s32 %s92, 1
      %s94 = scalar_select %p91, %s92, %s93
      %p97 = pneg %p91
      %p98 = scmp.eq.s32.totalorder %s14, 1
      %p99 = por %p97, %p98
      %p100 = scmp.ne.s32.totalorder %s92, %s95
      %p101 = scmp.eq.s32.totalorder %s14, 0
      %p102 = por %p100, %p101
      %p103 = scmp.ne.s32.totalorder %s92, %s95
      %p104 = scmp.eq.s32.totalorder %s19, 1
      %p105 = por %p103, %p104
      %p106 = scmp.ne.s32.totalorder %s95, %s96
      %p107 = scmp.eq.s32.totalorder %s19, 0
      %p108 = por %p106, %p107
      %p109 = scmp.ne.s32.totalorder %s95, %s96
      %p110 = scmp.eq.s32.totalorder %s20, 1
      %p111 = por %p109, %p110
      %p113 = scmp.ne.s32.totalorder %s96, %s112
      %p114 = scmp.eq.s32.totalorder %s20, 0
      %p115 = por %p113, %p114
      %s116 = ssub.s32 %s14, %s21
      %p117 = scmp.eq.s32.totalorder %s116, 0
      %s119 = sadd.s32 %s118, 1
      %s120 = scalar_select %p117, %s118, %s119
      %p123 = pneg %p117
      %p124 = scmp.eq.s32.totalorder %s14, 1
      %p125 = por %p123, %p124
      %p126 = scmp.ne.s32.totalorder %s118, %s121
      %p127 = scmp.eq.s32.totalorder %s14, 0
      %p128 = por %p126, %p127
      %p129 = scmp.ne.s32.totalorder %s118, %s121
      %p130 = scmp.eq.s32.totalorder %s19, 1
      %p131 = por %p129, %p130
      %p132 = scmp.ne.s32.totalorder %s121, %s122
      %p133 = scmp.eq.s32.totalorder %s19, 0
      %p134 = por %p132, %p133
      %p135 = scmp.ne.s32.totalorder %s121, %s122
      %p136 = scmp.eq.s32.totalorder %s20, 1
      %p137 = por %p135, %p136
      %p139 = scmp.ne.s32.totalorder %s122, %s138
      %p140 = scmp.eq.s32.totalorder %s20, 0
      %p141 = por %p139, %p140
      %p142 = scmp.le.s32.totalorder 1, %s14
      %p143 = scmp.lt.s32.totalorder %s14, 3
      %p144 = pnand %p142, %p143
      %p145 = pneg %p144
      // Predicated region
      $region9: #{tpu_custom_call.1} parent=5 // pred_check
        _
      $region10: #{tpu_custom_call.1} parent=5 // pred_check_branch
        %147 = sbr.rel (%p144) target = $region12
      $region11: #{tpu_custom_call.1} parent=5 // pred_region
        %s148 = ssub.s32 %s14, 1
        // Predicated region
        $region13: #{tpu_custom_call.1} parent=11 // pred_check
          %p149 = pneg %p35
        $region14: #{tpu_custom_call.1} parent=11 // pred_check_branch
          %151 = sbr.rel (%p149) target = $region16
        $region15: #{tpu_custom_call.1} parent=11 // pred_region
          %s153 = ssub.s32 192, 192
          %154 = vsyncadd [#allocation3], %s153
          %s155 = sshll.u32 [#allocation2], 4
          %s156 = int_to_ptr.vmem [resolvable:$true] %s155
          %161 = dma.hbm_to_vmem [thread:$0]  %s0, 192, %s156, [#allocation3], 64, 64, 4
        $region16: #{tpu_custom_call.1} parent=11 // pred_fallthru
          _
        // Predicated region
        $region17: #{tpu_custom_call.1} parent=11 // pred_check
          %p162 = pneg %p56
        $region18: #{tpu_custom_call.1} parent=11 // pred_check_branch
          %164 = sbr.rel (%p162) target = $region20
        $region19: #{tpu_custom_call.1} parent=11 // pred_region
          _
        $region20: #{tpu_custom_call.1} parent=11 // pred_fallthru
          _
      $region12: #{tpu_custom_call.1} parent=5 // pred_fallthru
        _
      %p165 = scmp.lt.s32.totalorder %s14, 2
      // Predicated region
      $region21: #{tpu_custom_call.1} parent=5 // pred_check
        %p166 = pneg %p165
      $region22: #{tpu_custom_call.1} parent=5 // pred_check_branch
        %168 = sbr.rel (%p166) target = $region24
      $region23: #{tpu_custom_call.1} parent=5 // pred_region
        // Predicated region
        $region25: #{tpu_custom_call.1} parent=23 // pred_check
          %p169 = pneg %p76
        $region26: #{tpu_custom_call.1} parent=23 // pred_check_branch
          %171 = sbr.rel (%p169) target = $region28
        $region27: #{tpu_custom_call.1} parent=23 // pred_region
          %p172 = scmp.lt.s32.totalorder %s14, 1
          %s173 = scalar_select %p172, %s14, 1
          %s174 = smul.addr %s173, 4
          %s175 = scalar_lea.vmem %s2, %s174
        $region28: #{tpu_custom_call.1} parent=23 // pred_fallthru
          _
        // Predicated region
        $region29: #{tpu_custom_call.1} parent=23 // pred_check
          %p176 = pneg %p102
        $region30: #{tpu_custom_call.1} parent=23 // pred_check_branch
          %178 = sbr.rel (%p176) target = $region32
        $region31: #{tpu_custom_call.1} parent=23 // pred_region
          %p179 = scmp.lt.s32.totalorder %s14, 1
          %s180 = scalar_select %p179, %s14, 1
          %s181 = smul.addr %s180, 4
          %s182 = scalar_lea.vmem %s3, %s181
        $region32: #{tpu_custom_call.1} parent=23 // pred_fallthru
          _
      $region24: #{tpu_custom_call.1} parent=5 // pred_fallthru
        _
      %p183 = scmp.le.s32.totalorder 1, %s14
      %p184 = scmp.lt.s32.totalorder %s14, 3
      %p185 = pnand %p183, %p184
      %p186 = pneg %p185
      // Predicated region
      $region33: #{tpu_custom_call.1} parent=5 // pred_check
        _
      $region34: #{tpu_custom_call.1} parent=5 // pred_check_branch
        %188 = sbr.rel (%p185) target = $region36
      $region35: #{tpu_custom_call.1} parent=5 // pred_region
        %s189 = ssub.s32 %s14, 1
        // Predicated region
        $region37: #{tpu_custom_call.1} parent=35 // pred_check
          %p190 = pneg %p35
        $region38: #{tpu_custom_call.1} parent=35 // pred_check_branch
          %192 = sbr.rel (%p190) target = $region40
        $region39: #{tpu_custom_call.1} parent=35 // pred_region
          %193 = dma.done [#allocation3], 192
        $region40: #{tpu_custom_call.1} parent=35 // pred_fallthru
          _
        %p194 = pneg %p35
        %p195 = pneg %p32
        %p196 = pneg %p56
        %p197 = pneg %p53
        %p198 = scmp.lt.s32.totalorder %s19, 1
        %s199 = scalar_select %p198, %s19, 1
        %s200 = smul.addr %s199, 4
        %s201 = scalar_lea.vmem %s2, %s200
        %p202 = pneg %p82
        %p203 = pneg %p79
        %p204 = scmp.lt.s32.totalorder %s19, 1
        %s205 = scalar_select %p204, %s19, 1
        %s206 = smul.addr %s205, 4
        %s207 = scalar_lea.vmem %s3, %s206
        %p208 = pneg %p108
        %p209 = pneg %p105
        %p210 = pneg %p134
        %p211 = pneg %p131
        %s212 = sand.u32 %s121, 1
        %s213 = scalar_lea.sflag [#allocation4], %s212
        %s214 = sand.u32 %s121, 1
        %s215 = smul.addr %s214, 4
        %s216 = scalar_lea.vmem [#allocation5], %s215
        %p217 = scmp.lt.s32.totalorder %s19, 1
        %s218 = scalar_select %p217, %s19, 1
        %s219 = smul.addr %s218, 4
        %s220 = scalar_lea.vmem %s2, %s219
        %p221 = scmp.lt.s32.totalorder %s19, 1
        %s222 = scalar_select %p221, %s19, 1
        %s223 = smul.addr %s222, 4
        %s224 = scalar_lea.vmem %s3, %s223
        %v225 = vld [vmem:[%s220] sm:$0xf]
        %v226 = vld [vmem:[%s224] sm:$0xf]
        %v227 = vld [vmem:[#allocation2] sm:$0xf]
        %s228 = scalar_lea.vmem [#allocation2], 4
        %v229 = vld [vmem:[%s228] sm:$0xf]
        %vm230 = vcmask 31744
        %v232 = vsel %vm230, %v229, 0
        %vm234 = vcmask 1043456
        %v236 = vsel %vm234, %v226, 0
        %238 = vmatprep.subr.mxu0 0.0
        %239 = vmatpush1.msra.mxu0 %v236
        %240 = vmatprep.subr.mxu0 0.0
        %241 = vmatpush1.msra.mxu0 0.0
        %242 = vmatprep.subr.mxu0 0.0
        %243 = vmatpush1.msra.mxu0 0.0
        %244 = vmatprep.subr.mxu0 0.0
        %245 = vmatpush1.msra.mxu0 0.0
        %246 = vmatprep.subr.mxu0 0.0
        %247 = vmatpush1.msra.mxu0 0.0
        %248 = vmatprep.subr.mxu0 0.0
        %249 = vmatpush1.msra.mxu0 0.0
        %250 = vmatprep.subr.mxu0 0.0
        %251 = vmatpush1.msra.mxu0 0.0
        %252 = vmatprep.subr.mxu0 0.0
        %253 = vmatpush1.msra.mxu0 0.0
        %254 = vmatprep.subr.mxu0 0.0
        %255 = vmatpush1.msra.mxu0 0.0
        %256 = vmatprep.subr.mxu0 0.0
        %257 = vmatpush1.msra.mxu0 0.0
        %258 = vmatprep.subr.mxu0 0.0
        %259 = vmatpush1.msra.mxu0 0.0
        %260 = vmatprep.subr.mxu0 0.0
        %261 = vmatpush1.msra.mxu0 0.0
        %262 = vmatprep.subr.mxu0 0.0
        %263 = vmatpush1.msra.mxu0 0.0
        %264 = vmatprep.subr.mxu0 0.0
        %265 = vmatpush1.msra.mxu0 0.0
        %266 = vmatprep.subr.mxu0 0.0
        %267 = vmatpush1.msra.mxu0 0.0
        %268 = vmatprep.subr.mxu0 0.0
        %269 = vmatpush1.msra.mxu0 0.0
        %270 = vmatprep.subr.mxu0 0.0
        %271 = vmatpush1.msra.mxu0 0.0
        %272 = vmatprep.subr.mxu0 0.0
        %273 = vmatpush1.msra.mxu0 0.0
        %274 = vmatprep.subr.mxu0 0.0
        %275 = vmatpush1.msra.mxu0 0.0
        %276 = vmatprep.subr.mxu0 0.0
        %277 = vmatpush1.msra.mxu0 0.0
        %278 = vmatprep.subr.mxu0 0.0
        %279 = vmatpush1.msra.mxu0 0.0
        %280 = vmatprep.subr.mxu0 0.0
        %281 = vmatpush1.msra.mxu0 0.0
        %282 = vmatprep.subr.mxu0 0.0
        %283 = vmatpush1.msra.mxu0 0.0
        %284 = vmatprep.subr.mxu0 0.0
        %285 = vmatpush1.msra.mxu0 0.0
        %286 = vmatprep.subr.mxu0 0.0
        %287 = vmatpush1.msra.mxu0 0.0
        %288 = vmatprep.subr.mxu0 0.0
        %289 = vmatpush1.msra.mxu0 0.0
        %290 = vmatprep.subr.mxu0 0.0
        %291 = vmatpush1.msra.mxu0 0.0
        %292 = vmatprep.subr.mxu0 0.0
        %293 = vmatpush1.msra.mxu0 0.0
        %294 = vmatprep.subr.mxu0 0.0
        %295 = vmatpush1.msra.mxu0 0.0
        %296 = vmatprep.subr.mxu0 0.0
        %297 = vmatpush1.msra.mxu0 0.0
        %298 = vmatprep.subr.mxu0 0.0
        %299 = vmatpush1.msra.mxu0 0.0
        %300 = vmatprep.subr.mxu0 0.0
        %301 = vmatpush1.msra.mxu0 0.0
        %302 = vmatprep.mubr.f32.mxu0 0.0
        %303 = vmatmul.mubr.f32.gmra.mrb[0].mxu0 %v232
        %v304 = vpop.f32.mrb[0].mxu0
        %v305 = vadd.f32 0.0, %v304
        %v306 = vpop.f32.mrb[0].mxu0
        %307 = vdwg.mxu0
        %v309 = vsel %vm230, %v227, 0
        %v312 = vsel %vm234, %v225, 0
        %314 = vmatprep.subr.mxu0 0.0
        %315 = vmatpush1.msra.mxu0 %v312
        %316 = vmatprep.subr.mxu0 0.0
        %317 = vmatpush1.msra.mxu0 0.0
        %318 = vmatprep.subr.mxu0 0.0
        %319 = vmatpush1.msra.mxu0 0.0
        %320 = vmatprep.subr.mxu0 0.0
        %321 = vmatpush1.msra.mxu0 0.0
        %322 = vmatprep.subr.mxu0 0.0
        %323 = vmatpush1.msra.mxu0 0.0
        %324 = vmatprep.subr.mxu0 0.0
        %325 = vmatpush1.msra.mxu0 0.0
        %326 = vmatprep.subr.mxu0 0.0
        %327 = vmatpush1.msra.mxu0 0.0
        %328 = vmatprep.subr.mxu0 0.0
        %329 = vmatpush1.msra.mxu0 0.0
        %330 = vmatprep.subr.mxu0 0.0
        %331 = vmatpush1.msra.mxu0 0.0
        %332 = vmatprep.subr.mxu0 0.0
        %333 = vmatpush1.msra.mxu0 0.0
        %334 = vmatprep.subr.mxu0 0.0
        %335 = vmatpush1.msra.mxu0 0.0
        %336 = vmatprep.subr.mxu0 0.0
        %337 = vmatpush1.msra.mxu0 0.0
        %338 = vmatprep.subr.mxu0 0.0
        %339 = vmatpush1.msra.mxu0 0.0
        %340 = vmatprep.subr.mxu0 0.0
        %341 = vmatpush1.msra.mxu0 0.0
        %342 = vmatprep.subr.mxu0 0.0
        %343 = vmatpush1.msra.mxu0 0.0
        %344 = vmatprep.subr.mxu0 0.0
        %345 = vmatpush1.msra.mxu0 0.0
        %346 = vmatprep.subr.mxu0 0.0
        %347 = vmatpush1.msra.mxu0 0.0
        %348 = vmatprep.subr.mxu0 0.0
        %349 = vmatpush1.msra.mxu0 0.0
        %350 = vmatprep.subr.mxu0 0.0
        %351 = vmatpush1.msra.mxu0 0.0
        %352 = vmatprep.subr.mxu0 0.0
        %353 = vmatpush1.msra.mxu0 0.0
        %354 = vmatprep.subr.mxu0 0.0
        %355 = vmatpush1.msra.mxu0 0.0
        %356 = vmatprep.subr.mxu0 0.0
        %357 = vmatpush1.msra.mxu0 0.0
        %358 = vmatprep.subr.mxu0 0.0
        %359 = vmatpush1.msra.mxu0 0.0
        %360 = vmatprep.subr.mxu0 0.0
        %361 = vmatpush1.msra.mxu0 0.0
        %362 = vmatprep.subr.mxu0 0.0
        %363 = vmatpush1.msra.mxu0 0.0
        %364 = vmatprep.subr.mxu0 0.0
        %365 = vmatpush1.msra.mxu0 0.0
        %366 = vmatprep.subr.mxu0 0.0
        %367 = vmatpush1.msra.mxu0 0.0
        %368 = vmatprep.subr.mxu0 0.0
        %369 = vmatpush1.msra.mxu0 0.0
        %370 = vmatprep.subr.mxu0 0.0
        %371 = vmatpush1.msra.mxu0 0.0
        %372 = vmatprep.subr.mxu0 0.0
        %373 = vmatpush1.msra.mxu0 0.0
        %374 = vmatprep.subr.mxu0 0.0
        %375 = vmatpush1.msra.mxu0 0.0
        %376 = vmatprep.subr.mxu0 0.0
        %377 = vmatpush1.msra.mxu0 0.0
        %378 = vmatprep.mubr.f32.mxu0 0.0
        %379 = vmatmul.mubr.f32.gmra.mrb[0].mxu0 %v309
        %v380 = vpop.f32.mrb[0].mxu0
        %v381 = vadd.f32 %v305, %v380
        %v382 = vpop.f32.mrb[0].mxu0
        %383 = vdwg.mxu0
        %s384 = scalar_lea.vmem [#allocation2], 8
        %v385 = vld [vmem:[%s384] sm:$0xf]
        %386 = vrot.lane.b32.xlu0 %v225, 127
        %v387 = vpop.permute.xlu0 %386
        %v389 = vsel %vm230, %v385, 0
        %v391 = vsel %vm234, %v387, 0
        %393 = vmatprep.subr.mxu0 0.0
        %394 = vmatpush1.msra.mxu0 %v391
        %395 = vmatprep.subr.mxu0 0.0
        %396 = vmatpush1.msra.mxu0 0.0
        %397 = vmatprep.subr.mxu0 0.0
        %398 = vmatpush1.msra.mxu0 0.0
        %399 = vmatprep.subr.mxu0 0.0
        %400 = vmatpush1.msra.mxu0 0.0
        %401 = vmatprep.subr.mxu0 0.0
        %402 = vmatpush1.msra.mxu0 0.0
        %403 = vmatprep.subr.mxu0 0.0
        %404 = vmatpush1.msra.mxu0 0.0
        %405 = vmatprep.subr.mxu0 0.0
        %406 = vmatpush1.msra.mxu0 0.0
        %407 = vmatprep.subr.mxu0 0.0
        %408 = vmatpush1.msra.mxu0 0.0
        %409 = vmatprep.subr.mxu0 0.0
        %410 = vmatpush1.msra.mxu0 0.0
        %411 = vmatprep.subr.mxu0 0.0
        %412 = vmatpush1.msra.mxu0 0.0
        %413 = vmatprep.subr.mxu0 0.0
        %414 = vmatpush1.msra.mxu0 0.0
        %415 = vmatprep.subr.mxu0 0.0
        %416 = vmatpush1.msra.mxu0 0.0
        %417 = vmatprep.subr.mxu0 0.0
        %418 = vmatpush1.msra.mxu0 0.0
        %419 = vmatprep.subr.mxu0 0.0
        %420 = vmatpush1.msra.mxu0 0.0
        %421 = vmatprep.subr.mxu0 0.0
        %422 = vmatpush1.msra.mxu0 0.0
        %423 = vmatprep.subr.mxu0 0.0
        %424 = vmatpush1.msra.mxu0 0.0
        %425 = vmatprep.subr.mxu0 0.0
        %426 = vmatpush1.msra.mxu0 0.0
        %427 = vmatprep.subr.mxu0 0.0
        %428 = vmatpush1.msra.mxu0 0.0
        %429 = vmatprep.subr.mxu0 0.0
        %430 = vmatpush1.msra.mxu0 0.0
        %431 = vmatprep.subr.mxu0 0.0
        %432 = vmatpush1.msra.mxu0 0.0
        %433 = vmatprep.subr.mxu0 0.0
        %434 = vmatpush1.msra.mxu0 0.0
        %435 = vmatprep.subr.mxu0 0.0
        %436 = vmatpush1.msra.mxu0 0.0
        %437 = vmatprep.subr.mxu0 0.0
        %438 = vmatpush1.msra.mxu0 0.0
        %439 = vmatprep.subr.mxu0 0.0
        %440 = vmatpush1.msra.mxu0 0.0
        %441 = vmatprep.subr.mxu0 0.0
        %442 = vmatpush1.msra.mxu0 0.0
        %443 = vmatprep.subr.mxu0 0.0
        %444 = vmatpush1.msra.mxu0 0.0
        %445 = vmatprep.subr.mxu0 0.0
        %446 = vmatpush1.msra.mxu0 0.0
        %447 = vmatprep.subr.mxu0 0.0
        %448 = vmatpush1.msra.mxu0 0.0
        %449 = vmatprep.subr.mxu0 0.0
        %450 = vmatpush1.msra.mxu0 0.0
        %451 = vmatprep.subr.mxu0 0.0
        %452 = vmatpush1.msra.mxu0 0.0
        %453 = vmatprep.subr.mxu0 0.0
        %454 = vmatpush1.msra.mxu0 0.0
        %455 = vmatprep.subr.mxu0 0.0
        %456 = vmatpush1.msra.mxu0 0.0
        %457 = vmatprep.mubr.f32.mxu0 0.0
        %458 = vmatmul.mubr.f32.gmra.mrb[0].mxu0 %v389
        %v459 = vpop.f32.mrb[0].mxu0
        %v460 = vadd.f32 0.0, %v459
        %v461 = vpop.f32.mrb[0].mxu0
        %462 = vdwg.mxu0
        %v463 = vadd.f32 %v381, %v460
        %v464 = vld [vmem:[%s1] sm:$0xf]
        %466 = vset.pattern.permute.xlu0 0
        %467 = vperm.xlu0 %466, %v464
        %v468 = vpop.permute.xlu0 %467
        %v470 = vadd.f32 %v463, %v468
        %vm471 = vcmask 60416
        %472 = vst.msk [vmem:[%s216] sm:$0xf] %vm471, %v470
        %s473 = sand.u32 %s121, 1
        %s474 = scalar_lea.sflag [#allocation4], %s473
        %s475 = sand.u32 %s121, 1
        %s476 = smul.addr %s475, 4
        %s477 = scalar_lea.vmem [#allocation5], %s476
        // Predicated region
        $region41: #{tpu_custom_call.1} parent=35 // pred_check
          %p478 = pneg %p131
        $region42: #{tpu_custom_call.1} parent=35 // pred_check_branch
          %480 = sbr.rel (%p478) target = $region44
        $region43: #{tpu_custom_call.1} parent=35 // pred_region
          %s482 = ssub.s32 64, 64
          %483 = vsyncadd %s474, %s482
          %s484 = smul.addr %s19, 64
          %s485 = scalar_lea.hbm %s4, %s484
          %s487 = sshll.u32 %s477, 4
          %s488 = int_to_ptr.vmem [resolvable:$true] %s487
          %490 = dma.vmem_to_hbm [thread:$0]  %s488, 64, %s485, %s474
        $region44: #{tpu_custom_call.1} parent=35 // pred_fallthru
          _
      $region36: #{tpu_custom_call.1} parent=5 // pred_fallthru
        _
      %p491 = scmp.le.s32.totalorder 2, %s14
      // Predicated region
      $region45: #{tpu_custom_call.1} parent=5 // pred_check
        %p492 = pneg %p491
      $region46: #{tpu_custom_call.1} parent=5 // pred_check_branch
        %494 = sbr.rel (%p492) target = $region48
      $region47: #{tpu_custom_call.1} parent=5 // pred_region
        %s495 = ssub.s32 %s14, 2
        // Predicated region
        $region49: #{tpu_custom_call.1} parent=47 // pred_check
          %p496 = pneg %p137
        $region50: #{tpu_custom_call.1} parent=47 // pred_check_branch
          %498 = sbr.rel (%p496) target = $region52
        $region51: #{tpu_custom_call.1} parent=47 // pred_region
          %s499 = sand.u32 %s122, 1
          %s500 = scalar_lea.sflag [#allocation4], %s499
          %s501 = sand.u32 %s122, 1
          %s502 = smul.addr %s501, 4
          %s503 = scalar_lea.vmem [#allocation5], %s502
          %504 = dma.done %s500, 64
        $region52: #{tpu_custom_call.1} parent=47 // pred_fallthru
          _
      $region48: #{tpu_custom_call.1} parent=5 // pred_fallthru
        _
    $region6: #{tpu_custom_call.1} parent=1 // loop_footer
      %s18 = sadd.s32 1, %s14
    $region7: #{tpu_custom_call.1} parent=1 // loop_footer_branch
      %13 = sbr.rel target = $region3
    $region8: #{tpu_custom_call.1} parent=1 // loop_exit
      _
    %505 = vsyncpa [#allocation3], 1
    %s506 = scalar_lea.sflag [#allocation3], 1
    %507 = vsyncpa %s506, 1
    %508 = vsyncpa [#allocation4], 1
    %s509 = scalar_lea.sflag [#allocation4], 1
    %510 = vsyncpa %s509, 1

</llo_original>
